<compile_context>
chip_gen: v6e
topology: v6e:2x2x1
jax: 0.10.0
libtpu: 0.0.40
codegen_flags: <defaults>
</compile_context>

<pallas_src>
import functools

import jax
import jax.numpy as jnp
from jax import lax
from jax.experimental import pallas as pl
from jax.experimental.pallas import tpu as pltpu

EPS = 1e-5


# ---------------------------------------------------------------------------
# VMEM budgeting (per generation)
# ---------------------------------------------------------------------------
@functools.lru_cache(maxsize=None)
def _vmem_caps():
    """Returns (activation-tile byte budget, vmem_limit_bytes) for this chip."""
    cap = 64 << 20
    try:
        info = pltpu.get_tpu_info()
        cap = int(getattr(info, "vmem_capacity_bytes", cap)) or cap
    except Exception:
        pass
    limit = max(32 << 20, min(cap - (16 << 20), 96 << 20))
    budget = max(6 << 20, min(cap * 3 // 8, 24 << 20))
    return int(budget), int(limit)


def _pick_rows(total_rows, row_bytes, budget):
    """Largest row-tile (multiple of 8) whose double-buffered bytes fit budget."""
    t = max(int(budget), 0) // max(int(row_bytes), 1)
    t = (t // 8) * 8
    t = max(8, min(t, 4096))
    return total_rows if total_rows <= t else t


def _round_up(x, m):
    return ((x + m - 1) // m) * m


def _lane_pack_factor(m, cout):
    """Pack k consecutive rows into the lane dim so stores are 128 lanes wide."""
    if cout >= 128 or 128 % cout != 0:
        return 1
    k = 128 // cout
    while k > 1 and m % k != 0:
        k //= 2
    return k


# ---------------------------------------------------------------------------
# Pallas kernels
# ---------------------------------------------------------------------------
def _conv1x1_bn_kernel(x_ref, w_ref, s_ref, b_ref, o_ref, *, relu):
    """1x1 conv tile: (TM, Cin) @ (Cin, Cout), fused BN affine (+ optional ReLU)."""
    y = jnp.dot(x_ref[...], w_ref[...], preferred_element_type=jnp.float32)
    y = y * s_ref[...] + b_ref[...]
    if relu:
        y = jnp.maximum(y, 0.0)
    o_ref[...] = y.astype(o_ref.dtype)


def _conv1x1_bn_add_relu_kernel(x_ref, w_ref, s_ref, b_ref, xs_ref, o_ref):
    """Fused conv3(1x1)+BN + identity-shortcut add + ReLU."""
    y = jnp.dot(x_ref[...], w_ref[...], preferred_element_type=jnp.float32)
    y = y * s_ref[...] + b_ref[...] + xs_ref[...].astype(jnp.float32)
    o_ref[...] = jnp.maximum(y, 0.0).astype(o_ref.dtype)


def _conv1x1_bn_proj_add_relu_kernel(x_ref, w_ref, s_ref, b_ref,
                                     xs_ref, wsc_ref, ssc_ref, bsc_ref, o_ref,
                                     *, cin):
    """Fused conv3(1x1)+BN + projection shortcut (strided 1x1 conv + BN) + ReLU.

    The shortcut tile arrives as (TR, 1, wo, stride*cin); the BlockSpec already
    picked the even-H rows and the leading `cin` lanes of each group are the
    even-W samples, so the strided subsample costs no extra HBM pass.
    """
    y = jnp.dot(x_ref[...], w_ref[...], preferred_element_type=jnp.float32)
    y = y * s_ref[...] + b_ref[...]
    tr, _, wo, _ = xs_ref.shape
    xs = xs_ref[:, 0, :, :cin].reshape(tr * wo, cin)
    sc = jnp.dot(xs, wsc_ref[...], preferred_element_type=jnp.float32)
    sc = sc * ssc_ref[...] + bsc_ref[...]
    o_ref[...] = jnp.maximum(y + sc, 0.0).astype(o_ref.dtype)


def _make_conv3x3_kernel(n_phase, taps, nrows):
    """Per-image 3x3 conv + BN + ReLU.

    The zero-padded image (or its 4 stride-2 parity phases), flattened to
    (S, C) with a sublane-aligned row pitch, lives in VMEM.  Each tap is a
    contiguous shifted window of `nrows` rows; nine (nrows, C) @ (C, Cout)
    matmuls accumulate in f32.  The padded-width result is written with a
    single contiguous store; the wrapper strips the width padding.
    """
    def kernel(*refs):
        phase_refs = refs[:n_phase]
        w_ref, s_ref, b_ref, o_ref = refs[n_phase:]
        acc = None
        for t, p, d in taps:                      # static, unrolled (9 taps)
            patch = phase_refs[p][0, d:d + nrows, :]
            contrib = jnp.dot(patch, w_ref[t],
                              preferred_element_type=jnp.float32)
            acc = contrib if acc is None else acc + contrib
        y = jnp.maximum(acc * s_ref[...] + b_ref[...], 0.0)
        o_ref[0, :, :] = y.astype(o_ref.dtype)
    return kernel


# ---------------------------------------------------------------------------
# Kernel wrappers
# ---------------------------------------------------------------------------
def _fold_bn(gamma, beta, mean, var):
    scale = gamma / jnp.sqrt(var + EPS)
    bias = beta - mean * scale
    return (scale.reshape(1, -1).astype(jnp.float32),
            bias.reshape(1, -1).astype(jnp.float32))


def _conv1x1_bn(x2d, w, scale, bias, *, relu, out_dtype):
    m, cin = x2d.shape
    cout = w.shape[1]
    k = _lane_pack_factor(m, cout)
    if k > 1:
        # Lane-dense packing: k consecutive rows share one 128-lane store.
        # Free reshapes of contiguous memory + block-diagonal weight.
        x2d = x2d.reshape(m // k, k * cin)
        w = jnp.kron(jnp.eye(k, dtype=w.dtype), w)
        scale = jnp.tile(scale, (1, k))
        bias = jnp.tile(bias, (1, k))
    mp, cinp = x2d.shape
    coutp = k * cout

    budget, limit = _vmem_caps()
    out_b = jnp.dtype(out_dtype).itemsize
    resident = cinp * coutp * w.dtype.itemsize + 2 * coutp * 4
    row_bytes = 2 * (cinp * x2d.dtype.itemsize + coutp * out_b)
    tm = _pick_rows(mp, row_bytes, budget - 2 * resident)

    kern = functools.partial(_conv1x1_bn_kernel, relu=relu)
    out = pl.pallas_call(
        kern,
        out_shape=jax.ShapeDtypeStruct((mp, coutp), out_dtype),
        grid=(pl.cdiv(mp, tm),),
        in_specs=[
            pl.BlockSpec((tm, cinp), lambda i: (i, 0)),
            pl.BlockSpec((cinp, coutp), lambda i: (0, 0)),     # resident weight
            pl.BlockSpec((1, coutp), lambda i: (0, 0)),
            pl.BlockSpec((1, coutp), lambda i: (0, 0)),
        ],
        out_specs=pl.BlockSpec((tm, coutp), lambda i: (i, 0)),
        compiler_params=pltpu.CompilerParams(
            dimension_semantics=("parallel",), vmem_limit_bytes=limit),
    )(x2d, w, scale, bias)
    return out.reshape(m, cout)                                # free reshape


def _conv1x1_bn_add_relu(x2d, w, scale, bias, xs2d, *, out_dtype):
    m, cin = x2d.shape
    cout = w.shape[1]
    k = _lane_pack_factor(m, cout)
    if k > 1:
        x2d = x2d.reshape(m // k, k * cin)
        xs2d = xs2d.reshape(m // k, k * cout)
        w = jnp.kron(jnp.eye(k, dtype=w.dtype), w)
        scale = jnp.tile(scale, (1, k))
        bias = jnp.tile(bias, (1, k))
    mp, cinp = x2d.shape
    coutp = k * cout

    budget, limit = _vmem_caps()
    out_b = jnp.dtype(out_dtype).itemsize
    resident = cinp * coutp * w.dtype.itemsize + 2 * coutp * 4
    row_bytes = 2 * (cinp * x2d.dtype.itemsize
                     + coutp * xs2d.dtype.itemsize + coutp * out_b)
    tm = _pick_rows(mp, row_bytes, budget - 2 * resident)

    out = pl.pallas_call(
        _conv1x1_bn_add_relu_kernel,
        out_shape=jax.ShapeDtypeStruct((mp, coutp), out_dtype),
        grid=(pl.cdiv(mp, tm),),
        in_specs=[
            pl.BlockSpec((tm, cinp), lambda i: (i, 0)),
            pl.BlockSpec((cinp, coutp), lambda i: (0, 0)),
            pl.BlockSpec((1, coutp), lambda i: (0, 0)),
            pl.BlockSpec((1, coutp), lambda i: (0, 0)),
            pl.BlockSpec((tm, coutp), lambda i: (i, 0)),
        ],
        out_specs=pl.BlockSpec((tm, coutp), lambda i: (i, 0)),
        compiler_params=pltpu.CompilerParams(
            dimension_semantics=("parallel",), vmem_limit_bytes=limit),
    )(x2d, w, scale, bias, xs2d)
    return out.reshape(m, cout)


def _conv1x1_bn_proj_add_relu(out2_nhwc, w, scale, bias,
                              x_nhwc, wsc, ssc, bsc, stride, *, out_dtype):
    n, ho, wo, planes = out2_nhwc.shape
    _, h, wdim, cin = x_nhwc.shape
    cout = w.shape[1]
    assert h == stride * ho and wdim == stride * wo
    R = n * ho

    x2 = out2_nhwc.reshape(R * wo, planes)
    # Free reshape that exposes the H/W parity axes; the BlockSpec picks parity
    # 0 along H and the kernel slices the leading cin lanes (parity 0 along W).
    xs = x_nhwc.reshape(R, stride, wo, stride * cin)

    budget, limit = _vmem_caps()
    out_b = jnp.dtype(out_dtype).itemsize
    resident = (planes + cin) * cout * w.dtype.itemsize + 4 * cout * 4
    row_bytes = 2 * wo * (planes * x2.dtype.itemsize
                          + stride * cin * xs.dtype.itemsize + cout * out_b)
    tr = _pick_rows(R, row_bytes, budget - 2 * resident)

    kern = functools.partial(_conv1x1_bn_proj_add_relu_kernel, cin=cin)
    out = pl.pallas_call(
        kern,
        out_shape=jax.ShapeDtypeStruct((R * wo, cout), out_dtype),
        grid=(pl.cdiv(R, tr),),
        in_specs=[
            pl.BlockSpec((tr * wo, planes), lambda i: (i, 0)),
            pl.BlockSpec((planes, cout), lambda i: (0, 0)),
            pl.BlockSpec((1, cout), lambda i: (0, 0)),
            pl.BlockSpec((1, cout), lambda i: (0, 0)),
            pl.BlockSpec((tr, 1, wo, stride * cin), lambda i: (i, 0, 0, 0)),
            pl.BlockSpec((cin, cout), lambda i: (0, 0)),
            pl.BlockSpec((1, cout), lambda i: (0, 0)),
            pl.BlockSpec((1, cout), lambda i: (0, 0)),
        ],
        out_specs=pl.BlockSpec((tr * wo, cout), lambda i: (i, 0)),
        compiler_params=pltpu.CompilerParams(
            dimension_semantics=("parallel",), vmem_limit_bytes=limit),
    )(x2, w, scale, bias, xs, wsc, ssc, bsc)
    return out.reshape(n, ho, wo, cout)


def _conv3x3_bn_relu(x_nhwc, w_hwio, scale, bias, stride, *, out_dtype):
    n, h, w, c = x_nhwc.shape
    cout = w_hwio.shape[-1]
    ho = (h - 1) // stride + 1
    wo = (w - 1) // stride + 1

    kh_kw = [(kh, kw) for kh in range(3) for kw in range(3)]
    if stride == 1:
        wrow = _round_up(w + 2, 8)                       # sublane-aligned row pitch
        xpad = jnp.pad(x_nhwc, ((0, 0), (1, 2), (1, wrow - w - 1), (0, 0)))
        phases = [xpad.reshape(n, (h + 3) * wrow, c)]
        taps = [(t, 0, kh * wrow + kw) for t, (kh, kw) in enumerate(kh_kw)]
    elif stride == 2:
        assert h % 2 == 0 and w % 2 == 0, "stride-2 3x3 conv expects even H, W"
        wrow = _round_up(wo + 1, 8)
        hrow = ho + 2
        xpad = jnp.pad(x_nhwc, ((0, 0), (1, 2 * hrow - h - 1),
                                (1, 2 * wrow - w - 1), (0, 0)))
        # Four spatial parity phases (~1x input traffic, not a 9x im2col).
        phases = [xpad[:, ph::2, pw::2, :].reshape(n, hrow * wrow, c)
                  for ph in range(2) for pw in range(2)]
        taps = [(t, 2 * (kh % 2) + (kw % 2), (kh // 2) * wrow + (kw // 2))
                for t, (kh, kw) in enumerate(kh_kw)]
    else:
        raise NotImplementedError(f"stride={stride}")

    nrows = ho * wrow                                    # padded-width output rows
    wcol = w_hwio.reshape(9, c, cout)
    kern = _make_conv3x3_kernel(len(phases), taps, nrows)
    _, limit = _vmem_caps()

    in_specs = ([pl.BlockSpec((1,) + p.shape[1:], lambda i: (i, 0, 0))
                 for p in phases]
                + [pl.BlockSpec((9, c, cout), lambda i: (0, 0, 0)),  # resident
                   pl.BlockSpec((1, cout), lambda i: (0, 0)),
                   pl.BlockSpec((1, cout), lambda i: (0, 0))])

    out = pl.pallas_call(
        kern,
        out_shape=jax.ShapeDtypeStruct((n, nrows, cout), out_dtype),
        grid=(n,),
        in_specs=in_specs,
        out_specs=pl.BlockSpec((1, nrows, cout), lambda i: (i, 0, 0)),
        compiler_params=pltpu.CompilerParams(
            dimension_semantics=("parallel",), vmem_limit_bytes=limit),
    )(*phases, wcol, scale, bias)

    # Strip the alignment pad (wrow -> wo): one cheap XLA slice of the block's
    # narrowest tensor.  TODO(synk): fold into the consumer kernel's index_map.
    out = out.reshape(n, ho, wrow, cout)[:, :, :wo, :]
    return out, ho, wo


# ---------------------------------------------------------------------------
# Bottleneck block, NHWC bf16 in / NHWC bf16 out (chain blocks without
# intermediate layout transposes; transpose once at the network boundary).
# ---------------------------------------------------------------------------
def bottleneck_forward(x_nhwc, params, stride):
    n, h, w, cin = x_nhwc.shape
    x_nhwc = x_nhwc.astype(jnp.bfloat16)
    planes = params["w1"].shape[1]
    out_planes = params["w3"].shape[1]

    # conv1 (1x1) + bn1 + relu
    s1, b1 = _fold_bn(params["bn1_gamma"], params["bn1_beta"],
                      params["bn1_mean"], params["bn1_var"])
    out1 = _conv1x1_bn(x_nhwc.reshape(n * h * w, cin),
                       params["w1"].astype(jnp.bfloat16), s1, b1,
                       relu=True, out_dtype=jnp.bfloat16)
    out1 = out1.reshape(n, h, w, planes)

    # conv2 (3x3, stride, pad=1) + bn2 + relu
    s2, b2 = _fold_bn(params["bn2_gamma"], params["bn2_beta"],
                      params["bn2_mean"], params["bn2_var"])
    out2, ho, wo = _conv3x3_bn_relu(out1, params["w2"].astype(jnp.bfloat16),
                                    s2, b2, stride, out_dtype=jnp.bfloat16)

    # conv3 (1x1) + bn3, fused with shortcut + residual add + relu.
    # Note: the residual is the bf16 inter-block activation (by design).
    s3, b3 = _fold_bn(params["bn3_gamma"], params["bn3_beta"],
                      params["bn3_mean"], params["bn3_var"])
    if "wsc" in params:
        ssc, bsc = _fold_bn(params["bnsc_gamma"], params["bnsc_beta"],
                            params["bnsc_mean"], params["bnsc_var"])
        out = _conv1x1_bn_proj_add_relu(
            out2, params["w3"].astype(jnp.bfloat16), s3, b3,
            x_nhwc, params["wsc"].astype(jnp.bfloat16), ssc, bsc, stride,
            out_dtype=jnp.bfloat16)
    else:
        assert stride == 1 and cin == out_planes
        out = _conv1x1_bn_add_relu(
            out2.reshape(n * ho * wo, planes),
            params["w3"].astype(jnp.bfloat16), s3, b3,
            x_nhwc.reshape(n * ho * wo, cin), out_dtype=jnp.bfloat16)
        out = out.reshape(n, ho, wo, out_planes)
    return out


# ---------------------------------------------------------------------------
# Deterministic parameter init (matches the shapes in Bottleneck.__init__)
# ---------------------------------------------------------------------------
def init_params(key, in_planes, planes, stride, expansion=4):
    out_planes = expansion * planes
    ks = iter(jax.random.split(key, 24))

    def conv_w(shape, fan_in):
        return jax.random.normal(next(ks), shape, jnp.float32) / jnp.sqrt(fan_in)

    def bn(c, prefix):
        return {
            f"{prefix}_gamma": 1.0 + 0.1 * jax.random.normal(next(ks), (c,), jnp.float32),
            f"{prefix}_beta": 0.1 * jax.random.normal(next(ks), (c,), jnp.float32),
            f"{prefix}_mean": 0.1 * jax.random.normal(next(ks), (c,), jnp.float32),
            f"{prefix}_var": 0.5 + jax.random.uniform(next(ks), (c,), jnp.float32),
        }

    params = {
        "w1": conv_w((in_planes, planes), in_planes),            # 1x1 (Cin, Cout)
        **bn(planes, "bn1"),
        "w2": conv_w((3, 3, planes, planes), 9 * planes),        # 3x3 HWIO
        **bn(planes, "bn2"),
        "w3": conv_w((planes, out_planes), planes),              # 1x1 (Cin, Cout)
        **bn(out_planes, "bn3"),
    }
    if stride != 1 or in_planes != out_planes:
        params["wsc"] = conv_w((in_planes, out_planes), in_planes)
        params.update(bn(out_planes, "bnsc"))
    return params


# ---------------------------------------------------------------------------
# Pure-JAX reference (NCHW, like PyTorch) for correctness check
# ---------------------------------------------------------------------------
def bottleneck_ref(x, params, stride):
    dn = ("NCHW", "OIHW", "NCHW")

    def conv(v, w_oihw, s, pad):
        return lax.conv_general_dilated(v, w_oihw, (s, s), pad,
                                        dimension_numbers=dn,
                                        precision=lax.Precision.HIGHEST)

    def bn(v, g, b, m, var):
        rs = lambda a: a.reshape(1, -1, 1, 1)
        return (v - rs(m)) / jnp.sqrt(rs(var) + EPS) * rs(g) + rs(b)

    w1 = params["w1"].T[:, :, None, None]
    out = jax.nn.relu(bn(conv(x, w1, 1, [(0, 0), (0, 0)]),
                         params["bn1_gamma"], params["bn1_beta"],
                         params["bn1_mean"], params["bn1_var"]))
    w2 = jnp.transpose(params["w2"], (3, 2, 0, 1))
    out = jax.nn.relu(bn(conv(out, w2, stride, [(1, 1), (1, 1)]),
                         params["bn2_gamma"], params["bn2_beta"],
                         params["bn2_mean"], params["bn2_var"]))
    w3 = params["w3"].T[:, :, None, None]
    out = bn(conv(out, w3, 1, [(0, 0), (0, 0)]),
             params["bn3_gamma"], params["bn3_beta"],
             params["bn3_mean"], params["bn3_var"])
    if "wsc" in params:
        wsc = params["wsc"].T[:, :, None, None]
        sc = bn(conv(x, wsc, stride, [(0, 0), (0, 0)]),
                params["bnsc_gamma"], params["bnsc_beta"],
                params["bnsc_mean"], params["bnsc_var"])
    else:
        sc = x
    return jax.nn.relu(out + sc)


# ---------------------------------------------------------------------------
if __name__ == "__main__":
    key = jax.random.PRNGKey(0)
    kx, kp1, kp2 = jax.random.split(key, 3)

    in_planes, planes = 16, 8
    x = jax.random.normal(kx, (2, in_planes, 16, 16), jnp.float32)
    p1 = init_params(kp1, in_planes, planes, stride=2)   # projection shortcut
    p2 = init_params(kp2, 4 * planes, planes, stride=1)  # identity shortcut

    # NHWC layout only at the network boundary; blocks chain in NHWC bf16.
    x_nhwc = jnp.transpose(x, (0, 2, 3, 1))
    y_nhwc = bottleneck_forward(x_nhwc, p1, stride=2)
    y_nhwc = bottleneck_forward(y_nhwc, p2, stride=1)
    y = jnp.transpose(y_nhwc, (0, 3, 1, 2)).astype(jnp.float32)
    y = jax.block_until_ready(y)

    ref = bottleneck_ref(bottleneck_ref(x, p1, 2), p2, 1)
    assert y.shape == (2, 4 * planes, 8, 8), y.shape
    err = float(jnp.max(jnp.abs(y - ref)))
    # bf16 matmuls + bf16 inter-block activations (f32 accumulation) -> loose tol.
    assert jnp.allclose(y, ref, atol=2e-1, rtol=2e-1), err
    print("KERNEL_OK")
</pallas_src>

<mosaic_0001>
module attributes {stable_mosaic.version = 11 : i64} {
  func.func @_conv1x1_bn_kernel(%arg0: i32, %arg1: memref<32x256xbf16, #tpu.memory_space<vmem>>, %arg2: memref<256x128xbf16, #tpu.memory_space<vmem>>, %arg3: memref<1x128xf32, #tpu.memory_space<vmem>>, %arg4: memref<1x128xf32, #tpu.memory_space<vmem>>, %arg5: memref<32x128xbf16, #tpu.memory_space<vmem>>) attributes {dimension_semantics = [#tpu.dimension_semantics<parallel>], iteration_bounds = array<i64: 1>, scalar_prefetch = 0 : i64, scratch_operands = 0 : i64, tpu.core_type = #tpu.core_type<tc>, window_params = [{transform_indices = @transform_0, window_bounds = array<i64: 32, 256>}, {pipeline_mode = #tpu.pipeline_mode<synchronous>, transform_indices = @transform_1, window_bounds = array<i64: 256, 128>}, {pipeline_mode = #tpu.pipeline_mode<synchronous>, transform_indices = @transform_2, window_bounds = array<i64: 1, 128>}, {pipeline_mode = #tpu.pipeline_mode<synchronous>, transform_indices = @transform_3, window_bounds = array<i64: 1, 128>}, {transform_indices = @transform_4, window_bounds = array<i64: 32, 128>}]} {
    %c0 = arith.constant 0 : index
    %c0_0 = arith.constant 0 : index
    %0 = vector.load %arg1[%c0, %c0_0] : memref<32x256xbf16, #tpu.memory_space<vmem>>, vector<32x256xbf16>
    %c0_1 = arith.constant 0 : index
    %c0_2 = arith.constant 0 : index
    %1 = vector.load %arg2[%c0_1, %c0_2] : memref<256x128xbf16, #tpu.memory_space<vmem>>, vector<256x128xbf16>
    %cst = arith.constant dense<0.000000e+00> : vector<32x128xf32>
    %2 = tpu.matmul %0, %1, %cst {dimension_numbers = #tpu.dot_dimension_numbers<[1], [0], [0], [1], [0, 0, 1, 1], [], []>} : vector<32x256xbf16>, vector<256x128xbf16>, vector<32x128xf32> -> vector<32x128xf32>
    %c0_3 = arith.constant 0 : index
    %c0_4 = arith.constant 0 : index
    %3 = vector.load %arg3[%c0_3, %c0_4] : memref<1x128xf32, #tpu.memory_space<vmem>>, vector<1x128xf32>
    %4 = vector.broadcast %3 : vector<1x128xf32> to vector<32x128xf32>
    %5 = arith.mulf %2, %4 : vector<32x128xf32>
    %c0_5 = arith.constant 0 : index
    %c0_6 = arith.constant 0 : index
    %6 = vector.load %arg4[%c0_5, %c0_6] : memref<1x128xf32, #tpu.memory_space<vmem>>, vector<1x128xf32>
    %7 = vector.broadcast %6 : vector<1x128xf32> to vector<32x128xf32>
    %8 = arith.addf %5, %7 : vector<32x128xf32>
    %cst_7 = arith.constant 0.000000e+00 : f32
    %9 = vector.broadcast %cst_7 : f32 to vector<32x128xf32>
    %10 = arith.maximumf %8, %9 : vector<32x128xf32>
    %11 = arith.truncf %10 : vector<32x128xf32> to vector<32x128xbf16>
    %c0_8 = arith.constant 0 : index
    %c0_9 = arith.constant 0 : index
    %12 = vector.load %arg5[%c0_8, %c0_9] : memref<32x128xbf16, #tpu.memory_space<vmem>>, vector<32x128xbf16>
    tpu.vector_store %arg5[%c0_8, %c0_9], %11 {strides = array<i32>} : memref<32x128xbf16, #tpu.memory_space<vmem>>, vector<32x128xbf16>,
    return
  }
  func.func @transform_0(%arg0: i32) -> (i32, i32) {
    %c0_i32 = arith.constant 0 : i32
    %c0_i32_0 = arith.constant 0 : i32
    return %arg0, %c0_i32 : i32, i32
  }
  func.func @transform_1(%arg0: i32) -> (i32, i32) {
    %c0_i32 = arith.constant 0 : i32
    %c0_i32_0 = arith.constant 0 : i32
    %c0_i32_1 = arith.constant 0 : i32
    return %c0_i32, %c0_i32_0 : i32, i32
  }
  func.func @transform_2(%arg0: i32) -> (i32, i32) {
    %c0_i32 = arith.constant 0 : i32
    %c0_i32_0 = arith.constant 0 : i32
    %c0_i32_1 = arith.constant 0 : i32
    return %c0_i32, %c0_i32_0 : i32, i32
  }
  func.func @transform_3(%arg0: i32) -> (i32, i32) {
    %c0_i32 = arith.constant 0 : i32
    %c0_i32_0 = arith.constant 0 : i32
    %c0_i32_1 = arith.constant 0 : i32
    return %c0_i32, %c0_i32_0 : i32, i32
  }
  func.func @transform_4(%arg0: i32) -> (i32, i32) {
    %c0_i32 = arith.constant 0 : i32
    %c0_i32_0 = arith.constant 0 : i32
    return %arg0, %c0_i32 : i32, i32
  }
}

</mosaic_0001>

<llo_original>
// kernel: tpu_custom_call.1
$region0: #{tpu_custom_call.1}
  #allocation0 [shape = 'u32[]', space=smem, size = 0x4, offset = 0x4, fixed_abs, tag = 'smem constant byte address 0x4 - core index']
  #allocation1 [shape = 'u32[144,128]{1,0:T(1,128)}', space=vmem, size = 0x12000, scoped, tag = 'internal scratch']
  %s0 = inlined_call_operand.hbm [shape: bf16[32,256], index: 0, kind: input, shape index: {}]
  %s1 = inlined_call_operand.hbm [shape: bf16[256,128], index: 1, kind: input, shape index: {}]
  %s2 = inlined_call_operand.vmem [shape: f32[1,128], index: 2, kind: input, shape index: {}]
  %s3 = inlined_call_operand.vmem [shape: f32[1,128], index: 3, kind: input, shape index: {}]
  %s4 = inlined_call_operand.hbm [shape: bf16[32,128], index: 4, kind: output, shape index: {}]
  %s5 = sld [smem:[#allocation0]]
  $region34: #{tpu_custom_call.1} parent=0
    _
  %s7 = ssub.s32 1, %s5
  %s8 = scalar_select 0, %s7, %s5
  $region1: #{tpu_custom_call.1} parent=0
    #allocation2 [shape = 'u8[16384]{0}', space=vmem, size = 0x4000, scoped, tag = 'input window, operand 0, single buffered']
    #allocation3 [shape = 's32[1]{0}', space=sflag, size = 0x4, scoped, tag = 'scoped memory for tpu_custom_call.1']
    #allocation4 [shape = 's32[1]{0}', space=sflag, size = 0x4, scoped, tag = 'scoped memory for tpu_custom_call.1']
    #allocation5 [shape = 'u8[65536]{0}', space=vmem, size = 0x10000, scoped, tag = 'input window, operand 1, single buffered']
    #allocation6 [shape = 's32[1]{0}', space=sflag, size = 0x4, scoped, tag = 'scoped memory for tpu_custom_call.1']
    #allocation7 [shape = 'u8[8192]{0}', space=vmem, size = 0x2000, scoped, tag = 'output window, operand 0, single buffered']
    %9 = vsyncpa [#allocation3], 0
    %10 = vsyncpa [#allocation6], 0
    %11 = vsyncpa [#allocation4], 0
    // Predicated region
    $region2: #{tpu_custom_call.1} parent=1 // pred_check
      _
    $region3: #{tpu_custom_call.1} parent=1 // pred_check_branch
      %13 = sbr.rel (0) target = $region5
    $region4: #{tpu_custom_call.1} parent=1 // pred_region
      %s15 = ssub.s32 512, 512
      %16 = vsyncadd [#allocation3], %s15
      %s17 = sshll.u32 [#allocation2], 4
      %s18 = int_to_ptr.vmem [resolvable:$true] %s17
      %23 = dma.hbm_to_vmem [thread:$0]  %s0, 512, %s18, [#allocation3], 128, 128, 8
    $region5: #{tpu_custom_call.1} parent=1 // pred_fallthru
      _
    // Predicated region
    $region6: #{tpu_custom_call.1} parent=1 // pred_check
      _
    $region7: #{tpu_custom_call.1} parent=1 // pred_check_branch
      %25 = sbr.rel (0) target = $region9
    $region8: #{tpu_custom_call.1} parent=1 // pred_region
      %s27 = ssub.s32 2048, 2048
      %28 = vsyncadd [#allocation6], %s27
      %s29 = sshll.u32 [#allocation5], 4
      %s30 = int_to_ptr.vmem [resolvable:$true] %s29
      %35 = dma.hbm_to_vmem [thread:$0]  %s1, 2048, %s30, [#allocation6], 64, 64, 4
    $region9: #{tpu_custom_call.1} parent=1 // pred_fallthru
      _
    // Predicated region
    $region10: #{tpu_custom_call.1} parent=1 // pred_check
      _
    $region11: #{tpu_custom_call.1} parent=1 // pred_check_branch
      %37 = sbr.rel (0) target = $region13
    $region12: #{tpu_custom_call.1} parent=1 // pred_region
      _
    $region13: #{tpu_custom_call.1} parent=1 // pred_fallthru
      _
    // Predicated region
    $region14: #{tpu_custom_call.1} parent=1 // pred_check
      _
    $region15: #{tpu_custom_call.1} parent=1 // pred_check_branch
      %39 = sbr.rel (0) target = $region17
    $region16: #{tpu_custom_call.1} parent=1 // pred_region
      _
    $region17: #{tpu_custom_call.1} parent=1 // pred_fallthru
      _
    // Predicated region
    $region18: #{tpu_custom_call.1} parent=1 // pred_check
      _
    $region19: #{tpu_custom_call.1} parent=1 // pred_check_branch
      %41 = sbr.rel (0) target = $region21
    $region20: #{tpu_custom_call.1} parent=1 // pred_region
      %42 = dma.done [#allocation3], 512
    $region21: #{tpu_custom_call.1} parent=1 // pred_fallthru
      _
    // Predicated region
    $region22: #{tpu_custom_call.1} parent=1 // pred_check
      _
    $region23: #{tpu_custom_call.1} parent=1 // pred_check_branch
      %44 = sbr.rel (0) target = $region25
    $region24: #{tpu_custom_call.1} parent=1 // pred_region
      %45 = dma.done [#allocation6], 2048
    $region25: #{tpu_custom_call.1} parent=1 // pred_fallthru
      _
    %v47 = vld [vmem:[#allocation2] sm:$0xff]
    %v48 = vld [vmem:[#allocation2 + $0x8] sm:$0xff]
    %v49 = vld [vmem:[#allocation2 + $0x10] sm:$0xff]
    %v50 = vld [vmem:[#allocation2 + $0x18] sm:$0xff]
    %v51 = vld [vmem:[#allocation5] sm:$0xf]
    %v52 = vld [vmem:[#allocation5 + $0x4] sm:$0xf]
    %v53 = vld [vmem:[#allocation5 + $0x8] sm:$0xf]
    %v54 = vld [vmem:[#allocation5 + $0xc] sm:$0xf]
    %v55 = vld [vmem:[#allocation5 + $0x10] sm:$0xf]
    %v56 = vld [vmem:[#allocation5 + $0x14] sm:$0xf]
    %v57 = vld [vmem:[#allocation5 + $0x18] sm:$0xf]
    %v58 = vld [vmem:[#allocation5 + $0x1c] sm:$0xf]
    %v59 = vld [vmem:[#allocation5 + $0x20] sm:$0xf]
    %v60 = vld [vmem:[#allocation5 + $0x24] sm:$0xf]
    %v61 = vld [vmem:[#allocation5 + $0x28] sm:$0xf]
    %v62 = vld [vmem:[#allocation5 + $0x2c] sm:$0xf]
    %v63 = vld [vmem:[#allocation5 + $0x30] sm:$0xf]
    %v64 = vld [vmem:[#allocation5 + $0x34] sm:$0xf]
    %v65 = vld [vmem:[#allocation5 + $0x38] sm:$0xf]
    %v66 = vld [vmem:[#allocation5 + $0x3c] sm:$0xf]
    %v67 = vld [vmem:[#allocation5 + $0x40] sm:$0xf]
    %v68 = vld [vmem:[#allocation5 + $0x44] sm:$0xf]
    %v69 = vld [vmem:[#allocation5 + $0x48] sm:$0xf]
    %v70 = vld [vmem:[#allocation5 + $0x4c] sm:$0xf]
    %v71 = vld [vmem:[#allocation5 + $0x50] sm:$0xf]
    %v72 = vld [vmem:[#allocation5 + $0x54] sm:$0xf]
    %v73 = vld [vmem:[#allocation5 + $0x58] sm:$0xf]
    %v74 = vld [vmem:[#allocation5 + $0x5c] sm:$0xf]
    %v75 = vld [vmem:[#allocation5 + $0x60] sm:$0xf]
    %v76 = vld [vmem:[#allocation5 + $0x64] sm:$0xf]
    %v77 = vld [vmem:[#allocation5 + $0x68] sm:$0xf]
    %v78 = vld [vmem:[#allocation5 + $0x6c] sm:$0xf]
    %v79 = vld [vmem:[#allocation5 + $0x70] sm:$0xf]
    %v80 = vld [vmem:[#allocation5 + $0x74] sm:$0xf]
    %v81 = vld [vmem:[#allocation5 + $0x78] sm:$0xf]
    %v82 = vld [vmem:[#allocation5 + $0x7c] sm:$0xf]
    %v87 = vunpack.c.l.b16 %v47
    %v88 = vunpack.c.h.b16 %v47
    %v89 = vunpack.c.l.b16 %v48
    %v90 = vunpack.c.h.b16 %v48
    %v91 = vunpack.c.l.b16 %v49
    %v92 = vunpack.c.h.b16 %v49
    %v93 = vunpack.c.l.b16 %v50
    %v94 = vunpack.c.h.b16 %v50
    %v95 = vpack.c.b16 %v89, %v87
    %v96 = vpack.c.b16 %v90, %v88
    %v97 = vpack.c.b16 %v93, %v91
    %v98 = vpack.c.b16 %v94, %v92
    %v135 = vunpack.c.l.b16 %v51
    %v136 = vunpack.c.l.b16 %v52
    %v137 = vunpack.c.l.b16 %v53
    %v138 = vunpack.c.l.b16 %v54
    %v139 = vunpack.c.l.b16 %v55
    %v140 = vunpack.c.l.b16 %v56
    %v141 = vunpack.c.l.b16 %v57
    %v142 = vunpack.c.l.b16 %v58
    %v143 = vunpack.c.l.b16 %v59
    %v144 = vunpack.c.l.b16 %v60
    %v145 = vunpack.c.l.b16 %v61
    %v146 = vunpack.c.l.b16 %v62
    %v147 = vunpack.c.l.b16 %v63
    %v148 = vunpack.c.l.b16 %v64
    %v149 = vunpack.c.l.b16 %v65
    %v150 = vunpack.c.l.b16 %v66
    %v151 = vunpack.c.l.b16 %v67
    %v152 = vunpack.c.l.b16 %v68
    %v153 = vunpack.c.l.b16 %v69
    %v154 = vunpack.c.l.b16 %v70
    %v155 = vunpack.c.l.b16 %v71
    %v156 = vunpack.c.l.b16 %v72
    %v157 = vunpack.c.l.b16 %v73
    %v158 = vunpack.c.l.b16 %v74
    %v159 = vunpack.c.l.b16 %v75
    %v160 = vunpack.c.l.b16 %v76
    %v161 = vunpack.c.l.b16 %v77
    %v162 = vunpack.c.l.b16 %v78
    %v163 = vunpack.c.l.b16 %v79
    %v164 = vunpack.c.l.b16 %v80
    %v165 = vunpack.c.l.b16 %v81
    %v166 = vunpack.c.l.b16 %v82
    %v167 = vpack.c.b16 %v136, %v135
    %v168 = vpack.c.b16 %v138, %v137
    %v169 = vpack.c.b16 %v140, %v139
    %v170 = vpack.c.b16 %v142, %v141
    %v171 = vpack.c.b16 %v144, %v143
    %v172 = vpack.c.b16 %v146, %v145
    %v173 = vpack.c.b16 %v148, %v147
    %v174 = vpack.c.b16 %v150, %v149
    %v175 = vpack.c.b16 %v152, %v151
    %v176 = vpack.c.b16 %v154, %v153
    %v177 = vpack.c.b16 %v156, %v155
    %v178 = vpack.c.b16 %v158, %v157
    %v179 = vpack.c.b16 %v160, %v159
    %v180 = vpack.c.b16 %v162, %v161
    %v181 = vpack.c.b16 %v164, %v163
    %v182 = vpack.c.b16 %v166, %v165
    %199 = vmatprep.subr.bf16.mxu0 0
    %200 = vmatpush1.bf16.msra.mxu0 %v174
    %201 = vmatprep.subr.bf16.mxu0 0
    %202 = vmatpush1.bf16.msra.mxu0 %v173
    %203 = vmatprep.subr.bf16.mxu0 0
    %204 = vmatpush1.bf16.msra.mxu0 %v172
    %205 = vmatprep.subr.bf16.mxu0 0
    %206 = vmatpush1.bf16.msra.mxu0 %v171
    %207 = vmatprep.subr.bf16.mxu0 0
    %208 = vmatpush1.bf16.msra.mxu0 %v170
    %209 = vmatprep.subr.bf16.mxu0 0
    %210 = vmatpush1.bf16.msra.mxu0 %v169
    %211 = vmatprep.subr.bf16.mxu0 0
    %212 = vmatpush1.bf16.msra.mxu0 %v168
    %213 = vmatprep.subr.bf16.mxu0 0
    %214 = vmatpush1.bf16.msra.mxu0 %v167
    %215 = vmatprep.subr.bf16.mxu0 0
    %216 = vmatpush2.bf16.msra.mxu0 %v182
    %217 = vmatprep.subr.bf16.mxu0 0
    %218 = vmatpush2.bf16.msra.mxu0 %v181
    %219 = vmatprep.subr.bf16.mxu0 0
    %220 = vmatpush2.bf16.msra.mxu0 %v180
    %221 = vmatprep.subr.bf16.mxu0 0
    %222 = vmatpush2.bf16.msra.mxu0 %v179
    %223 = vmatprep.subr.bf16.mxu0 0
    %224 = vmatpush2.bf16.msra.mxu0 %v178
    %225 = vmatprep.subr.bf16.mxu0 0
    %226 = vmatpush2.bf16.msra.mxu0 %v177
    %227 = vmatprep.subr.bf16.mxu0 0
    %228 = vmatpush2.bf16.msra.mxu0 %v176
    %229 = vmatprep.subr.bf16.mxu0 0
    %230 = vmatpush2.bf16.msra.mxu0 %v175
    %231 = vmatprep.mubr.bf16.mxu0 %v96
    %232 = vmatmul.mubr.bf16.gmra.mxu0 %v95
    %v233 = vpop.f32.mrf.mxu0
    %v234 = vadd.f32 0.0, %v233
    %v235 = vpop.f32.mrf.mxu0
    %v236 = vpop.f32.mrf.mxu0
    %v237 = vadd.f32 0.0, %v236
    %v238 = vpop.f32.mrf.mxu0
    %239 = vmatprep.mubr.bf16.mxu0 %v98
    %240 = vmatmul.mubr.bf16.gmra.mxu0 %v97
    %v241 = vpop.f32.mrf.mxu0
    %v242 = vadd.f32 0.0, %v241
    %v243 = vpop.f32.mrf.mxu0
    %v244 = vpop.f32.mrf.mxu0
    %v245 = vadd.f32 0.0, %v244
    %v246 = vpop.f32.mrf.mxu0
    %247 = vdwg.mxu0
    %v248 = vld [vmem:[%s2] sm:$0x1]
    %v250 = vlaneseq
    %v251 = vshrl.u32 %v250, 7
    %v252 = vsub.s32 0, %v251
    %v253 = vrot.slane %v248, %v252
    %v255 = vmul.f32 %v234, %v253
    %v256 = vmul.f32 %v237, %v253
    %v257 = vmul.f32 %v242, %v253
    %v258 = vmul.f32 %v245, %v253
    %v259 = vld [vmem:[%s3] sm:$0x1]
    %v261 = vlaneseq
    %v262 = vshrl.u32 %v261, 7
    %v263 = vsub.s32 0, %v262
    %v264 = vrot.slane %v259, %v263
    %v266 = vadd.f32 %v255, %v264
    %v267 = vadd.f32 %v256, %v264
    %v268 = vadd.f32 %v257, %v264
    %v269 = vadd.f32 %v258, %v264
    %v270 = vmax.f32 %v266, 0.0
    %v271 = vmax.f32 %v267, 0.0
    %v272 = vmax.f32 %v268, 0.0
    %v273 = vmax.f32 %v269, 0.0
    %v274 = vpack.c.bf16 %v271, %v270
    %v275 = vpack.c.bf16 %v273, %v272
    %v278 = vunpack.c.l.b16 %v274
    %v279 = vunpack.c.h.b16 %v274
    %v280 = vunpack.c.l.b16 %v275
    %v281 = vunpack.c.h.b16 %v275
    %v282 = vpack.c.b16 %v278, %v278
    %v283 = vpack.c.b16 %v279, %v279
    %v284 = vpack.c.b16 %v280, %v280
    %v285 = vpack.c.b16 %v281, %v281
    %290 = vst [vmem:[#allocation7] sm:$0xf] %v282
    %291 = vst [vmem:[#allocation7 + $0x4] sm:$0xf] %v283
    %292 = vst [vmem:[#allocation7 + $0x8] sm:$0xf] %v284
    %293 = vst [vmem:[#allocation7 + $0xc] sm:$0xf] %v285
    // Predicated region
    $region26: #{tpu_custom_call.1} parent=1 // pred_check
      _
    $region27: #{tpu_custom_call.1} parent=1 // pred_check_branch
      %295 = sbr.rel (0) target = $region29
    $region28: #{tpu_custom_call.1} parent=1 // pred_region
      %s297 = ssub.s32 256, 256
      %298 = vsyncadd [#allocation4], %s297
      %s299 = sshll.u32 [#allocation7], 4
      %s300 = int_to_ptr.vmem [resolvable:$true] %s299
      %305 = dma.vmem_to_hbm [thread:$0]  %s300, 256, %s4, [#allocation4], 64, 64, 4
    $region29: #{tpu_custom_call.1} parent=1 // pred_fallthru
      _
    // Predicated region
    $region30: #{tpu_custom_call.1} parent=1 // pred_check
      _
    $region31: #{tpu_custom_call.1} parent=1 // pred_check_branch
      %307 = sbr.rel (0) target = $region33
    $region32: #{tpu_custom_call.1} parent=1 // pred_region
      %308 = dma.done [#allocation4], 256
    $region33: #{tpu_custom_call.1} parent=1 // pred_fallthru
      _
    %309 = vsyncpa [#allocation3], 1
    %310 = vsyncpa [#allocation6], 1
    %311 = vsyncpa [#allocation4], 1

</llo_original>
